<compile_context>
chip_gen: v6e
topology: v6e:2x2x1
jax: 0.10.0
libtpu: 0.0.40
codegen_flags: <defaults>
</compile_context>

<pallas_src>
import jax
import jax.numpy as jnp
from jax.experimental import pallas as pl
from jax.experimental.pallas import tpu as pltpu

EPS = 1e-5


# ----------------------------------------------------------------------------- kernel
def bnmlp_kernel(x_ref, w1_ref, w2_ref, b_ref, bn_ref, o_ref):
    B, TM, D = x_ref.shape            # per-step tile: (batch, token-tile, feature)
    H = w1_ref.shape[1]
    BT = B * TM
    inv_n = 1.0 / float(B * H)        # BN reduces over (batch, feature)

    bn = bn_ref[...]                  # (TM, 4) f32: [gamma1, beta1, gamma2, beta2]
    b = b_ref[...]                    # (2, H)  f32: [b1; b2]

    def bn_relu(h2d, layer, out_dtype):
        # h2d: (BT, H) fp32. Per-token stats over (batch, feature), single pass.
        h3 = h2d.reshape(B, TM, H)
        g = bn[:, 2 * layer:2 * layer + 1].reshape(1, TM, 1)
        be = bn[:, 2 * layer + 1:2 * layer + 2].reshape(1, TM, 1)
        s1 = jnp.sum(h3, axis=(0, 2), keepdims=True)               # (1, TM, 1)
        s2 = jnp.sum(h3 * h3, axis=(0, 2), keepdims=True)
        mean = s1 * inv_n
        var = jnp.maximum(s2 * inv_n - mean * mean, 0.0)            # clamp: no NaN rsqrt
        scale = g * jax.lax.rsqrt(var + EPS)                        # EUP slot
        shift = be - mean * scale
        return jnp.maximum(h3 * scale + shift, 0.0).astype(out_dtype)

    # ---- layer 1: Linear (bf16 MXU, f32 acc) -> BN(tokens) -> ReLU (emit bf16) ----
    x2 = x_ref[...].reshape(BT, D)                                   # already bf16
    h = jnp.dot(x2, w1_ref[...], preferred_element_type=jnp.float32) + b[0:1, :]
    h = bn_relu(h, 0, jnp.bfloat16)                                  # (B, TM, H) bf16

    # ---- layer 2: Linear (bf16 MXU, f32 acc) -> BN(tokens) -> ReLU ----
    h2 = jnp.dot(h.reshape(BT, H), w2_ref[...],
                 preferred_element_type=jnp.float32) + b[1:2, :]     # (BT, H) f32
    o_ref[...] = bn_relu(h2, 1, o_ref.dtype)


# ----------------------------------------------------------------------------- sizing
def _tpu_vmem_capacity():
    try:
        return int(pltpu.get_tpu_info().vmem_capacity_bytes)
    except Exception:
        return 128 << 20          # conservative fallback (v5e/v6e capacity)


def _tile_bytes(B, tm, D, H):
    """Approximate per-step VMEM working set for a (B, tm) token tile."""
    bf16, f32 = 2, 4
    x_tile = 2 * B * tm * D * bf16          # double-buffered streamed input
    o_tile = 2 * B * tm * H * f32           # double-buffered streamed output
    bn_tile = 2 * tm * 4 * f32
    resident = D * H * bf16 + H * H * bf16 + 2 * H * f32   # single-buffered weights/bias
    interm = 3 * B * tm * H * f32           # h (f32), h (bf16), h2 (f32) upper bound
    return x_tile + o_tile + bn_tile + resident + interm


def _pick_token_tile(B, M, D, H, budget_bytes):
    """Largest tm (multiple of 8, dividing M) whose working set fits the VMEM budget."""
    best = 8
    t = 8
    while t <= M:
        if M % t == 0 and _tile_bytes(B, t, D, H) <= budget_bytes:
            best = t
        t += 8
    return best


# ----------------------------------------------------------------------------- wrapper
def pack_params(p):
    """bf16 weights + packed biases / BN params (do once; reuse across forward calls)."""
    return {
        "w1": p["w1"].astype(jnp.bfloat16),
        "w2": p["w2"].astype(jnp.bfloat16),
        "b": jnp.stack([p["b1"], p["b2"]], axis=0).astype(jnp.float32),        # (2, H)
        "bn": jnp.stack([p["g1"], p["be1"], p["g2"], p["be2"]], axis=1)
                 .astype(jnp.float32),                                          # (M, 4)
    }


def bnmlp_forward(x, packed, *, tm=None):
    B, M, D = x.shape
    H = packed["w1"].shape[1]

    # Pad token axis to a multiple of 8 (sublane alignment). BN is per-token, so padded
    # tokens are independent and simply sliced off at the end.
    Mp = ((M + 7) // 8) * 8
    bn = packed["bn"]
    if Mp != M:
        x = jnp.pad(x, ((0, 0), (0, Mp - M), (0, 0)))
        pad_bn = jnp.tile(jnp.asarray([[1.0, 0.0, 1.0, 0.0]], jnp.float32), (Mp - M, 1))
        bn = jnp.concatenate([bn, pad_bn], axis=0)

    x_bf = x.astype(jnp.bfloat16)     # halve streamed-input DMA bytes

    capacity = _tpu_vmem_capacity()
    budget = int(0.75 * capacity)     # leave headroom for compiler scratch
    if tm is None:
        tm = _pick_token_tile(B, Mp, D, H, budget)
    assert Mp % tm == 0 and tm % 8 == 0
    grid = (Mp // tm,)

    need = _tile_bytes(B, tm, D, H)
    vmem_limit = int(min(max(2 * need, 16 << 20), int(0.9 * capacity)))

    cost = pl.CostEstimate(
        flops=2 * B * Mp * (D * H + H * H),
        transcendentals=2 * Mp,
        bytes_accessed=(2 * (B * Mp * D + D * H + H * H)        # bf16 x + weights
                        + 4 * (B * Mp * H + 2 * H + 4 * Mp)),   # f32 out + bias + BN params
    )

    def resident(shape):
        idx = lambda i: tuple(0 for _ in shape)
        try:
            return pl.BlockSpec(shape, idx, pipeline_mode=pl.Buffered(1))
        except TypeError:             # older BlockSpec without pipeline_mode kwarg
            return pl.BlockSpec(shape, idx)

    out = pl.pallas_call(
        bnmlp_kernel,
        out_shape=jax.ShapeDtypeStruct((B, Mp, H), jnp.float32),
        grid_spec=pltpu.PrefetchScalarGridSpec(
            num_scalar_prefetch=0,
            grid=grid,
            in_specs=[
                pl.BlockSpec((B, tm, D), lambda i: (0, i, 0)),     # x tile (bf16, streamed)
                resident((D, H)),                                  # w1 (bf16, resident)
                resident((H, H)),                                  # w2 (bf16, resident)
                resident((2, H)),                                  # [b1; b2] (resident)
                pl.BlockSpec((tm, 4), lambda i: (i, 0)),           # [g1 be1 g2 be2] tile
            ],
            out_specs=pl.BlockSpec((B, tm, H), lambda i: (0, i, 0)),
        ),
        compiler_params=pltpu.CompilerParams(
            dimension_semantics=("parallel",),                     # 2-TC sharding on v7x
            vmem_limit_bytes=vmem_limit,
        ),
        cost_estimate=cost,
    )(x_bf, packed["w1"], packed["w2"], packed["b"], bn)

    return out[:, :M, :] if Mp != M else out


# ----------------------------------------------------------------------------- params / reference
def init_params(key, input_dim, h_dim, m_tokens):
    """PyTorch defaults: Linear weight/bias ~ U(+-1/sqrt(fan_in)); BN gamma=1, beta=0.
    Linear weights stored pre-transposed (in, out) so the kernel does x @ W."""
    k1, k2, k3, k4 = jax.random.split(key, 4)
    bound1 = 1.0 / (input_dim ** 0.5)
    bound2 = 1.0 / (h_dim ** 0.5)
    return {
        "w1": jax.random.uniform(k1, (input_dim, h_dim), jnp.float32, -bound1, bound1),
        "b1": jax.random.uniform(k2, (h_dim,), jnp.float32, -bound1, bound1),
        "g1": jnp.ones((m_tokens,), jnp.float32),
        "be1": jnp.zeros((m_tokens,), jnp.float32),
        "w2": jax.random.uniform(k3, (h_dim, h_dim), jnp.float32, -bound2, bound2),
        "b2": jax.random.uniform(k4, (h_dim,), jnp.float32, -bound2, bound2),
        "g2": jnp.ones((m_tokens,), jnp.float32),
        "be2": jnp.zeros((m_tokens,), jnp.float32),
    }


def bnmlp_reference(x, p):
    """Pure-JAX fp32 reference matching the PyTorch module in training mode."""
    def bn_relu(h, g, b):
        mean = jnp.mean(h, axis=(0, 2), keepdims=True)
        var = jnp.mean(jnp.square(h - mean), axis=(0, 2), keepdims=True)
        return jnp.maximum((h - mean) / jnp.sqrt(var + EPS) * g[None, :, None]
                           + b[None, :, None], 0.0)

    h = jnp.einsum("bmd,dh->bmh", x, p["w1"]) + p["b1"][None, None, :]
    h = bn_relu(h, p["g1"], p["be1"])
    h = jnp.einsum("bmh,hk->bmk", h, p["w2"]) + p["b2"][None, None, :]
    return bn_relu(h, p["g2"], p["be2"])


if __name__ == "__main__":
    # Small but lane/MXU-friendly shapes: batch=8, m_tokens=32 (multiple of 8),
    # input_dim=h_dim=128 -> BT = B*tm = 256 matmul rows on the auto-tiled path.
    B, M, D, H = 8, 32, 128, 128
    key = jax.random.PRNGKey(0)
    kx, kp = jax.random.split(key)
    x = jax.random.normal(kx, (B, M, D), dtype=jnp.float32)
    params = init_params(kp, D, H, M)
    packed = pack_params(params)

    out = jax.block_until_ready(bnmlp_forward(x, packed))            # auto tm (fat tile)
    out_tiled = jax.block_until_ready(bnmlp_forward(x, packed, tm=8))  # exercise 4-step grid

    ref = bnmlp_reference(x, params)
    assert out.shape == (B, M, H)
    # bf16 matmul operands (fp32 accumulation / BN) vs fp32 reference -> modest tolerance.
    assert jnp.allclose(out, ref, atol=2e-2, rtol=2e-2), "mismatch vs reference (auto tile)"
    assert jnp.allclose(out_tiled, ref, atol=2e-2, rtol=2e-2), "mismatch vs reference (tm=8)"
    print("KERNEL_OK")
</pallas_src>

<mosaic_0001>
module attributes {stable_mosaic.version = 11 : i64} {
  func.func @bnmlp_kernel(%arg0: i32, %arg1: memref<8x32x128xbf16, #tpu.memory_space<vmem>>, %arg2: memref<128x128xbf16, #tpu.memory_space<vmem>>, %arg3: memref<128x128xbf16, #tpu.memory_space<vmem>>, %arg4: memref<2x128xf32, #tpu.memory_space<vmem>>, %arg5: memref<32x4xf32, #tpu.memory_space<vmem>>, %arg6: memref<8x32x128xf32, #tpu.memory_space<vmem>>) attributes {dimension_semantics = [#tpu.dimension_semantics<parallel>], iteration_bounds = array<i64: 1>, scalar_prefetch = 0 : i64, scratch_operands = 0 : i64, tpu.core_type = #tpu.core_type<tc>, window_params = [{transform_indices = @transform_0, window_bounds = array<i64: 8, 32, 128>}, {pipeline_mode = #tpu.pipeline_mode<synchronous>, transform_indices = @transform_1, window_bounds = array<i64: 128, 128>}, {pipeline_mode = #tpu.pipeline_mode<synchronous>, transform_indices = @transform_2, window_bounds = array<i64: 128, 128>}, {pipeline_mode = #tpu.pipeline_mode<synchronous>, transform_indices = @transform_3, window_bounds = array<i64: 2, 128>}, {transform_indices = @transform_4, window_bounds = array<i64: 32, 4>}, {transform_indices = @transform_5, window_bounds = array<i64: 8, 32, 128>}]} {
    %c0 = arith.constant 0 : index
    %c0_0 = arith.constant 0 : index
    %0 = vector.load %arg5[%c0, %c0_0] : memref<32x4xf32, #tpu.memory_space<vmem>>, vector<32x4xf32>
    %c0_1 = arith.constant 0 : index
    %c0_2 = arith.constant 0 : index
    %1 = vector.load %arg4[%c0_1, %c0_2] : memref<2x128xf32, #tpu.memory_space<vmem>>, vector<2x128xf32>
    %c0_3 = arith.constant 0 : index
    %c0_4 = arith.constant 0 : index
    %c0_5 = arith.constant 0 : index
    %2 = vector.load %arg1[%c0_3, %c0_4, %c0_5] : memref<8x32x128xbf16, #tpu.memory_space<vmem>>, vector<8x32x128xbf16>
    %3 = vector.shape_cast %2 : vector<8x32x128xbf16> to vector<256x128xbf16>
    %c0_6 = arith.constant 0 : index
    %c0_7 = arith.constant 0 : index
    %4 = vector.load %arg2[%c0_6, %c0_7] : memref<128x128xbf16, #tpu.memory_space<vmem>>, vector<128x128xbf16>
    %cst = arith.constant dense<0.000000e+00> : vector<256x128xf32>
    %5 = tpu.matmul %3, %4, %cst {dimension_numbers = #tpu.dot_dimension_numbers<[1], [0], [0], [1], [0, 0, 1, 1], [], []>} : vector<256x128xbf16>, vector<128x128xbf16>, vector<256x128xf32> -> vector<256x128xf32>
    %6 = vector.extract_strided_slice %1 {offsets = [0, 0], sizes = [1, 128], strides = [1, 1]} : vector<2x128xf32> to vector<1x128xf32>
    %7 = vector.broadcast %6 : vector<1x128xf32> to vector<256x128xf32>
    %8 = arith.addf %5, %7 : vector<256x128xf32>
    %9 = vector.shape_cast %8 : vector<256x128xf32> to vector<8x32x128xf32>
    %10 = vector.extract_strided_slice %0 {offsets = [0, 0], sizes = [32, 1], strides = [1, 1]} : vector<32x4xf32> to vector<32x1xf32>
    %11 = vector.shape_cast %10 : vector<32x1xf32> to vector<1x32x1xf32>
    %12 = vector.extract_strided_slice %0 {offsets = [0, 1], sizes = [32, 1], strides = [1, 1]} : vector<32x4xf32> to vector<32x1xf32>
    %13 = vector.shape_cast %12 : vector<32x1xf32> to vector<1x32x1xf32>
    %cst_8 = arith.constant dense<0.000000e+00> : vector<32xf32>
    %14 = vector.multi_reduction <add>, %9, %cst_8 [0, 2] : vector<8x32x128xf32> to vector<32xf32>
    %15 = vector.shape_cast %14 : vector<32xf32> to vector<1x32x1xf32>
    %16 = arith.mulf %9, %9 : vector<8x32x128xf32>
    %cst_9 = arith.constant dense<0.000000e+00> : vector<32xf32>
    %17 = vector.multi_reduction <add>, %16, %cst_9 [0, 2] : vector<8x32x128xf32> to vector<32xf32>
    %18 = vector.shape_cast %17 : vector<32xf32> to vector<1x32x1xf32>
    %cst_10 = arith.constant 9.765625E-4 : f32
    %19 = vector.broadcast %cst_10 : f32 to vector<1x32x1xf32>
    %20 = arith.mulf %15, %19 : vector<1x32x1xf32>
    %cst_11 = arith.constant 9.765625E-4 : f32
    %21 = vector.broadcast %cst_11 : f32 to vector<1x32x1xf32>
    %22 = arith.mulf %18, %21 : vector<1x32x1xf32>
    %23 = arith.mulf %20, %20 : vector<1x32x1xf32>
    %24 = arith.subf %22, %23 : vector<1x32x1xf32>
    %cst_12 = arith.constant 0.000000e+00 : f32
    %25 = vector.broadcast %cst_12 : f32 to vector<1x32x1xf32>
    %26 = arith.maximumf %24, %25 : vector<1x32x1xf32>
    %cst_13 = arith.constant 9.99999974E-6 : f32
    %27 = vector.broadcast %cst_13 : f32 to vector<1x32x1xf32>
    %28 = arith.addf %26, %27 : vector<1x32x1xf32>
    %29 = math.rsqrt %28 : vector<1x32x1xf32>
    %30 = arith.mulf %11, %29 : vector<1x32x1xf32>
    %31 = arith.mulf %20, %30 : vector<1x32x1xf32>
    %32 = arith.subf %13, %31 : vector<1x32x1xf32>
    %33 = vector.broadcast %30 : vector<1x32x1xf32> to vector<8x32x128xf32>
    %34 = arith.mulf %9, %33 : vector<8x32x128xf32>
    %35 = vector.broadcast %32 : vector<1x32x1xf32> to vector<8x32x128xf32>
    %36 = arith.addf %34, %35 : vector<8x32x128xf32>
    %cst_14 = arith.constant 0.000000e+00 : f32
    %37 = vector.broadcast %cst_14 : f32 to vector<8x32x128xf32>
    %38 = arith.maximumf %36, %37 : vector<8x32x128xf32>
    %39 = arith.truncf %38 : vector<8x32x128xf32> to vector<8x32x128xbf16>
    %40 = vector.shape_cast %39 : vector<8x32x128xbf16> to vector<256x128xbf16>
    %c0_15 = arith.constant 0 : index
    %c0_16 = arith.constant 0 : index
    %41 = vector.load %arg3[%c0_15, %c0_16] : memref<128x128xbf16, #tpu.memory_space<vmem>>, vector<128x128xbf16>
    %cst_17 = arith.constant dense<0.000000e+00> : vector<256x128xf32>
    %42 = tpu.matmul %40, %41, %cst_17 {dimension_numbers = #tpu.dot_dimension_numbers<[1], [0], [0], [1], [0, 0, 1, 1], [], []>} : vector<256x128xbf16>, vector<128x128xbf16>, vector<256x128xf32> -> vector<256x128xf32>
    %43 = vector.extract_strided_slice %1 {offsets = [1, 0], sizes = [1, 128], strides = [1, 1]} : vector<2x128xf32> to vector<1x128xf32>
    %44 = vector.broadcast %43 : vector<1x128xf32> to vector<256x128xf32>
    %45 = arith.addf %42, %44 : vector<256x128xf32>
    %46 = vector.shape_cast %45 : vector<256x128xf32> to vector<8x32x128xf32>
    %47 = vector.extract_strided_slice %0 {offsets = [0, 2], sizes = [32, 1], strides = [1, 1]} : vector<32x4xf32> to vector<32x1xf32>
    %48 = vector.shape_cast %47 : vector<32x1xf32> to vector<1x32x1xf32>
    %49 = vector.extract_strided_slice %0 {offsets = [0, 3], sizes = [32, 1], strides = [1, 1]} : vector<32x4xf32> to vector<32x1xf32>
    %50 = vector.shape_cast %49 : vector<32x1xf32> to vector<1x32x1xf32>
    %cst_18 = arith.constant dense<0.000000e+00> : vector<32xf32>
    %51 = vector.multi_reduction <add>, %46, %cst_18 [0, 2] : vector<8x32x128xf32> to vector<32xf32>
    %52 = vector.shape_cast %51 : vector<32xf32> to vector<1x32x1xf32>
    %53 = arith.mulf %46, %46 : vector<8x32x128xf32>
    %cst_19 = arith.constant dense<0.000000e+00> : vector<32xf32>
    %54 = vector.multi_reduction <add>, %53, %cst_19 [0, 2] : vector<8x32x128xf32> to vector<32xf32>
    %55 = vector.shape_cast %54 : vector<32xf32> to vector<1x32x1xf32>
    %cst_20 = arith.constant 9.765625E-4 : f32
    %56 = vector.broadcast %cst_20 : f32 to vector<1x32x1xf32>
    %57 = arith.mulf %52, %56 : vector<1x32x1xf32>
    %cst_21 = arith.constant 9.765625E-4 : f32
    %58 = vector.broadcast %cst_21 : f32 to vector<1x32x1xf32>
    %59 = arith.mulf %55, %58 : vector<1x32x1xf32>
    %60 = arith.mulf %57, %57 : vector<1x32x1xf32>
    %61 = arith.subf %59, %60 : vector<1x32x1xf32>
    %cst_22 = arith.constant 0.000000e+00 : f32
    %62 = vector.broadcast %cst_22 : f32 to vector<1x32x1xf32>
    %63 = arith.maximumf %61, %62 : vector<1x32x1xf32>
    %cst_23 = arith.constant 9.99999974E-6 : f32
    %64 = vector.broadcast %cst_23 : f32 to vector<1x32x1xf32>
    %65 = arith.addf %63, %64 : vector<1x32x1xf32>
    %66 = math.rsqrt %65 : vector<1x32x1xf32>
    %67 = arith.mulf %48, %66 : vector<1x32x1xf32>
    %68 = arith.mulf %57, %67 : vector<1x32x1xf32>
    %69 = arith.subf %50, %68 : vector<1x32x1xf32>
    %70 = vector.broadcast %67 : vector<1x32x1xf32> to vector<8x32x128xf32>
    %71 = arith.mulf %46, %70 : vector<8x32x128xf32>
    %72 = vector.broadcast %69 : vector<1x32x1xf32> to vector<8x32x128xf32>
    %73 = arith.addf %71, %72 : vector<8x32x128xf32>
    %cst_24 = arith.constant 0.000000e+00 : f32
    %74 = vector.broadcast %cst_24 : f32 to vector<8x32x128xf32>
    %75 = arith.maximumf %73, %74 : vector<8x32x128xf32>
    %c0_25 = arith.constant 0 : index
    %c0_26 = arith.constant 0 : index
    %c0_27 = arith.constant 0 : index
    %76 = vector.load %arg6[%c0_25, %c0_26, %c0_27] : memref<8x32x128xf32, #tpu.memory_space<vmem>>, vector<8x32x128xf32>
    tpu.vector_store %arg6[%c0_25, %c0_26, %c0_27], %75 {strides = array<i32>} : memref<8x32x128xf32, #tpu.memory_space<vmem>>, vector<8x32x128xf32>,
    return
  }
  func.func @transform_0(%arg0: i32) -> (i32, i32, i32) {
    %c0_i32 = arith.constant 0 : i32
    %c0_i32_0 = arith.constant 0 : i32
    %c0_i32_1 = arith.constant 0 : i32
    return %c0_i32, %arg0, %c0_i32_0 : i32, i32, i32
  }
  func.func @transform_1(%arg0: i32) -> (i32, i32) {
    %c0_i32 = arith.constant 0 : i32
    %c0_i32_0 = arith.constant 0 : i32
    %c0_i32_1 = arith.constant 0 : i32
    return %c0_i32, %c0_i32_0 : i32, i32
  }
  func.func @transform_2(%arg0: i32) -> (i32, i32) {
    %c0_i32 = arith.constant 0 : i32
    %c0_i32_0 = arith.constant 0 : i32
    %c0_i32_1 = arith.constant 0 : i32
    return %c0_i32, %c0_i32_0 : i32, i32
  }
  func.func @transform_3(%arg0: i32) -> (i32, i32) {
    %c0_i32 = arith.constant 0 : i32
    %c0_i32_0 = arith.constant 0 : i32
    %c0_i32_1 = arith.constant 0 : i32
    return %c0_i32, %c0_i32_0 : i32, i32
  }
  func.func @transform_4(%arg0: i32) -> (i32, i32) {
    %c0_i32 = arith.constant 0 : i32
    %c0_i32_0 = arith.constant 0 : i32
    return %arg0, %c0_i32 : i32, i32
  }
  func.func @transform_5(%arg0: i32) -> (i32, i32, i32) {
    %c0_i32 = arith.constant 0 : i32
    %c0_i32_0 = arith.constant 0 : i32
    %c0_i32_1 = arith.constant 0 : i32
    return %c0_i32, %arg0, %c0_i32_0 : i32, i32, i32
  }
}

</mosaic_0001>

<llo_original>
// kernel: tpu_custom_call.1
$region0: #{tpu_custom_call.1}
  #allocation0 [shape = 'u32[]', space=smem, size = 0x4, offset = 0x4, fixed_abs, tag = 'smem constant byte address 0x4 - core index']
  #allocation1 [shape = 'u32[144,128]{1,0:T(1,128)}', space=vmem, size = 0x12000, scoped, tag = 'internal scratch']
  %s0 = inlined_call_operand.hbm [shape: bf16[8,32,128], index: 0, kind: input, shape index: {}]
  %s1 = inlined_call_operand.hbm [shape: bf16[128,128], index: 1, kind: input, shape index: {}]
  %s2 = inlined_call_operand.hbm [shape: bf16[128,128], index: 2, kind: input, shape index: {}]
  %s3 = inlined_call_operand.vmem [shape: f32[2,128], index: 3, kind: input, shape index: {}]
  %s4 = inlined_call_operand.vmem [shape: f32[32,4], index: 4, kind: input, shape index: {}]
  %s5 = inlined_call_operand.hbm [shape: f32[8,32,128], index: 5, kind: output, shape index: {}]
  %s6 = sld [smem:[#allocation0]]
  $region42: #{tpu_custom_call.1} parent=0
    _
  %s8 = ssub.s32 1, %s6
  %s9 = scalar_select 0, %s8, %s6
  $region1: #{tpu_custom_call.1} parent=0
    #allocation2 [shape = 'u8[65536]{0}', space=vmem, size = 0x10000, scoped, tag = 'input window, operand 0, single buffered']
    #allocation3 [shape = 's32[1]{0}', space=sflag, size = 0x4, scoped, tag = 'scoped memory for tpu_custom_call.1']
    #allocation4 [shape = 's32[1]{0}', space=sflag, size = 0x4, scoped, tag = 'scoped memory for tpu_custom_call.1']
    #allocation5 [shape = 'u8[32768]{0}', space=vmem, size = 0x8000, scoped, tag = 'input window, operand 1, single buffered']
    #allocation6 [shape = 's32[1]{0}', space=sflag, size = 0x4, scoped, tag = 'scoped memory for tpu_custom_call.1']
    #allocation7 [shape = 'u8[32768]{0}', space=vmem, size = 0x8000, scoped, tag = 'input window, operand 2, single buffered']
    #allocation8 [shape = 'u8[131072]{0}', space=vmem, size = 0x20000, scoped, tag = 'output window, operand 0, single buffered']
    %10 = vsyncpa [#allocation3], 0
    %11 = vsyncpa [#allocation6], 0
    %12 = vsyncpa [#allocation4], 0
    // Predicated region
    $region2: #{tpu_custom_call.1} parent=1 // pred_check
      _
    $region3: #{tpu_custom_call.1} parent=1 // pred_check_branch
      %14 = sbr.rel (0) target = $region5
    $region4: #{tpu_custom_call.1} parent=1 // pred_region
      %s16 = ssub.s32 2048, 2048
      %17 = vsyncadd [#allocation3], %s16
      %s18 = sshll.u32 [#allocation2], 4
      %s19 = int_to_ptr.vmem [resolvable:$true] %s18
      %24 = dma.hbm_to_vmem [thread:$0]  %s0, 2048, %s19, [#allocation3], 64, 64, 4
    $region5: #{tpu_custom_call.1} parent=1 // pred_fallthru
      _
    // Predicated region
    $region6: #{tpu_custom_call.1} parent=1 // pred_check
      _
    $region7: #{tpu_custom_call.1} parent=1 // pred_check_branch
      %26 = sbr.rel (0) target = $region9
    $region8: #{tpu_custom_call.1} parent=1 // pred_region
      %s28 = ssub.s32 1024, 1024
      %29 = vsyncadd [#allocation6], %s28
      %s30 = sshll.u32 [#allocation5], 4
      %s31 = int_to_ptr.vmem [resolvable:$true] %s30
      %36 = dma.hbm_to_vmem [thread:$0]  %s1, 1024, %s31, [#allocation6], 64, 64, 4
    $region9: #{tpu_custom_call.1} parent=1 // pred_fallthru
      _
    // Predicated region
    $region10: #{tpu_custom_call.1} parent=1 // pred_check
      _
    $region11: #{tpu_custom_call.1} parent=1 // pred_check_branch
      %38 = sbr.rel (0) target = $region13
    $region12: #{tpu_custom_call.1} parent=1 // pred_region
      %s40 = ssub.s32 1024, 1024
      %41 = vsyncadd [#allocation6], %s40
      %s42 = sshll.u32 [#allocation7], 4
      %s43 = int_to_ptr.vmem [resolvable:$true] %s42
      %48 = dma.hbm_to_vmem [thread:$0]  %s2, 1024, %s43, [#allocation6], 64, 64, 4
    $region13: #{tpu_custom_call.1} parent=1 // pred_fallthru
      _
    // Predicated region
    $region14: #{tpu_custom_call.1} parent=1 // pred_check
      _
    $region15: #{tpu_custom_call.1} parent=1 // pred_check_branch
      %50 = sbr.rel (0) target = $region17
    $region16: #{tpu_custom_call.1} parent=1 // pred_region
      _
    $region17: #{tpu_custom_call.1} parent=1 // pred_fallthru
      _
    // Predicated region
    $region18: #{tpu_custom_call.1} parent=1 // pred_check
      _
    $region19: #{tpu_custom_call.1} parent=1 // pred_check_branch
      %52 = sbr.rel (0) target = $region21
    $region20: #{tpu_custom_call.1} parent=1 // pred_region
      _
    $region21: #{tpu_custom_call.1} parent=1 // pred_fallthru
      _
    // Predicated region
    $region22: #{tpu_custom_call.1} parent=1 // pred_check
      _
    $region23: #{tpu_custom_call.1} parent=1 // pred_check_branch
      %54 = sbr.rel (0) target = $region25
    $region24: #{tpu_custom_call.1} parent=1 // pred_region
      %55 = dma.done [#allocation3], 2048
    $region25: #{tpu_custom_call.1} parent=1 // pred_fallthru
      _
    // Predicated region
    $region26: #{tpu_custom_call.1} parent=1 // pred_check
      _
    $region27: #{tpu_custom_call.1} parent=1 // pred_check_branch
      %57 = sbr.rel (0) target = $region29
    $region28: #{tpu_custom_call.1} parent=1 // pred_region
      %58 = dma.done [#allocation6], 1024
    $region29: #{tpu_custom_call.1} parent=1 // pred_fallthru
      _
    // Predicated region
    $region30: #{tpu_custom_call.1} parent=1 // pred_check
      _
    $region31: #{tpu_custom_call.1} parent=1 // pred_check_branch
      %60 = sbr.rel (0) target = $region33
    $region32: #{tpu_custom_call.1} parent=1 // pred_region
      %61 = dma.done [#allocation6], 1024
    $region33: #{tpu_custom_call.1} parent=1 // pred_fallthru
      _
    %v63 = vld [vmem:[%s4] sm:$0xff]
    %v64 = vld [vmem:[%s4 + $0x8] sm:$0xff]
    %v65 = vld [vmem:[%s4 + $0x10] sm:$0xff]
    %v66 = vld [vmem:[%s4 + $0x18] sm:$0xff]
    %v67 = vld [vmem:[%s3] sm:$0x3]
    %v68 = vld [vmem:[#allocation2] sm:$0xf]
    %v69 = vld [vmem:[#allocation2 + $0x4] sm:$0xf]
    %v70 = vld [vmem:[#allocation2 + $0x8] sm:$0xf]
    %v71 = vld [vmem:[#allocation2 + $0xc] sm:$0xf]
    %v72 = vld [vmem:[#allocation2 + $0x10] sm:$0xf]
    %v73 = vld [vmem:[#allocation2 + $0x14] sm:$0xf]
    %v74 = vld [vmem:[#allocation2 + $0x18] sm:$0xf]
    %v75 = vld [vmem:[#allocation2 + $0x1c] sm:$0xf]
    %v76 = vld [vmem:[#allocation2 + $0x20] sm:$0xf]
    %v77 = vld [vmem:[#allocation2 + $0x24] sm:$0xf]
    %v78 = vld [vmem:[#allocation2 + $0x28] sm:$0xf]
    %v79 = vld [vmem:[#allocation2 + $0x2c] sm:$0xf]
    %v80 = vld [vmem:[#allocation2 + $0x30] sm:$0xf]
    %v81 = vld [vmem:[#allocation2 + $0x34] sm:$0xf]
    %v82 = vld [vmem:[#allocation2 + $0x38] sm:$0xf]
    %v83 = vld [vmem:[#allocation2 + $0x3c] sm:$0xf]
    %v84 = vld [vmem:[#allocation2 + $0x40] sm:$0xf]
    %v85 = vld [vmem:[#allocation2 + $0x44] sm:$0xf]
    %v86 = vld [vmem:[#allocation2 + $0x48] sm:$0xf]
    %v87 = vld [vmem:[#allocation2 + $0x4c] sm:$0xf]
    %v88 = vld [vmem:[#allocation2 + $0x50] sm:$0xf]
    %v89 = vld [vmem:[#allocation2 + $0x54] sm:$0xf]
    %v90 = vld [vmem:[#allocation2 + $0x58] sm:$0xf]
    %v91 = vld [vmem:[#allocation2 + $0x5c] sm:$0xf]
    %v92 = vld [vmem:[#allocation2 + $0x60] sm:$0xf]
    %v93 = vld [vmem:[#allocation2 + $0x64] sm:$0xf]
    %v94 = vld [vmem:[#allocation2 + $0x68] sm:$0xf]
    %v95 = vld [vmem:[#allocation2 + $0x6c] sm:$0xf]
    %v96 = vld [vmem:[#allocation2 + $0x70] sm:$0xf]
    %v97 = vld [vmem:[#allocation2 + $0x74] sm:$0xf]
    %v98 = vld [vmem:[#allocation2 + $0x78] sm:$0xf]
    %v99 = vld [vmem:[#allocation2 + $0x7c] sm:$0xf]
    %v100 = vld [vmem:[#allocation5] sm:$0xf]
    %v101 = vld [vmem:[#allocation5 + $0x4] sm:$0xf]
    %v102 = vld [vmem:[#allocation5 + $0x8] sm:$0xf]
    %v103 = vld [vmem:[#allocation5 + $0xc] sm:$0xf]
    %v104 = vld [vmem:[#allocation5 + $0x10] sm:$0xf]
    %v105 = vld [vmem:[#allocation5 + $0x14] sm:$0xf]
    %v106 = vld [vmem:[#allocation5 + $0x18] sm:$0xf]
    %v107 = vld [vmem:[#allocation5 + $0x1c] sm:$0xf]
    %v108 = vld [vmem:[#allocation5 + $0x20] sm:$0xf]
    %v109 = vld [vmem:[#allocation5 + $0x24] sm:$0xf]
    %v110 = vld [vmem:[#allocation5 + $0x28] sm:$0xf]
    %v111 = vld [vmem:[#allocation5 + $0x2c] sm:$0xf]
    %v112 = vld [vmem:[#allocation5 + $0x30] sm:$0xf]
    %v113 = vld [vmem:[#allocation5 + $0x34] sm:$0xf]
    %v114 = vld [vmem:[#allocation5 + $0x38] sm:$0xf]
    %v115 = vld [vmem:[#allocation5 + $0x3c] sm:$0xf]
    %v116 = vlaneseq
    %v117 = vshrl.u32 %v116, 7
    %v118 = vsub.s32 0, %v117
    %v119 = vrot.slane %v67, %v118
    %v152 = vunpack.c.l.b16 %v68
    %v153 = vunpack.c.l.b16 %v69
    %v154 = vunpack.c.l.b16 %v70
    %v155 = vunpack.c.l.b16 %v71
    %v156 = vunpack.c.l.b16 %v72
    %v157 = vunpack.c.l.b16 %v73
    %v158 = vunpack.c.l.b16 %v74
    %v159 = vunpack.c.l.b16 %v75
    %v160 = vunpack.c.l.b16 %v76
    %v161 = vunpack.c.l.b16 %v77
    %v162 = vunpack.c.l.b16 %v78
    %v163 = vunpack.c.l.b16 %v79
    %v164 = vunpack.c.l.b16 %v80
    %v165 = vunpack.c.l.b16 %v81
    %v166 = vunpack.c.l.b16 %v82
    %v167 = vunpack.c.l.b16 %v83
    %v168 = vunpack.c.l.b16 %v84
    %v169 = vunpack.c.l.b16 %v85
    %v170 = vunpack.c.l.b16 %v86
    %v171 = vunpack.c.l.b16 %v87
    %v172 = vunpack.c.l.b16 %v88
    %v173 = vunpack.c.l.b16 %v89
    %v174 = vunpack.c.l.b16 %v90
    %v175 = vunpack.c.l.b16 %v91
    %v176 = vunpack.c.l.b16 %v92
    %v177 = vunpack.c.l.b16 %v93
    %v178 = vunpack.c.l.b16 %v94
    %v179 = vunpack.c.l.b16 %v95
    %v180 = vunpack.c.l.b16 %v96
    %v181 = vunpack.c.l.b16 %v97
    %v182 = vunpack.c.l.b16 %v98
    %v183 = vunpack.c.l.b16 %v99
    %v184 = vpack.c.b16 %v153, %v152
    %v185 = vpack.c.b16 %v155, %v154
    %v186 = vpack.c.b16 %v157, %v156
    %v187 = vpack.c.b16 %v159, %v158
    %v188 = vpack.c.b16 %v161, %v160
    %v189 = vpack.c.b16 %v163, %v162
    %v190 = vpack.c.b16 %v165, %v164
    %v191 = vpack.c.b16 %v167, %v166
    %v192 = vpack.c.b16 %v169, %v168
    %v193 = vpack.c.b16 %v171, %v170
    %v194 = vpack.c.b16 %v173, %v172
    %v195 = vpack.c.b16 %v175, %v174
    %v196 = vpack.c.b16 %v177, %v176
    %v197 = vpack.c.b16 %v179, %v178
    %v198 = vpack.c.b16 %v181, %v180
    %v199 = vpack.c.b16 %v183, %v182
    %v232 = vunpack.c.l.b16 %v100
    %v233 = vunpack.c.l.b16 %v101
    %v234 = vunpack.c.l.b16 %v102
    %v235 = vunpack.c.l.b16 %v103
    %v236 = vunpack.c.l.b16 %v104
    %v237 = vunpack.c.l.b16 %v105
    %v238 = vunpack.c.l.b16 %v106
    %v239 = vunpack.c.l.b16 %v107
    %v240 = vunpack.c.l.b16 %v108
    %v241 = vunpack.c.l.b16 %v109
    %v242 = vunpack.c.l.b16 %v110
    %v243 = vunpack.c.l.b16 %v111
    %v244 = vunpack.c.l.b16 %v112
    %v245 = vunpack.c.l.b16 %v113
    %v246 = vunpack.c.l.b16 %v114
    %v247 = vunpack.c.l.b16 %v115
    %v248 = vpack.c.b16 %v233, %v232
    %v249 = vpack.c.b16 %v235, %v234
    %v250 = vpack.c.b16 %v237, %v236
    %v251 = vpack.c.b16 %v239, %v238
    %v252 = vpack.c.b16 %v241, %v240
    %v253 = vpack.c.b16 %v243, %v242
    %v254 = vpack.c.b16 %v245, %v244
    %v255 = vpack.c.b16 %v247, %v246
    %264 = vmatprep.subr.bf16.mxu0 0
    %265 = vmatpush1.bf16.msra.mxu0 %v255
    %266 = vmatprep.subr.bf16.mxu0 0
    %267 = vmatpush1.bf16.msra.mxu0 %v254
    %268 = vmatprep.subr.bf16.mxu0 0
    %269 = vmatpush1.bf16.msra.mxu0 %v253
    %270 = vmatprep.subr.bf16.mxu0 0
    %271 = vmatpush1.bf16.msra.mxu0 %v252
    %272 = vmatprep.subr.bf16.mxu0 0
    %273 = vmatpush1.bf16.msra.mxu0 %v251
    %274 = vmatprep.subr.bf16.mxu0 0
    %275 = vmatpush1.bf16.msra.mxu0 %v250
    %276 = vmatprep.subr.bf16.mxu0 0
    %277 = vmatpush1.bf16.msra.mxu0 %v249
    %278 = vmatprep.subr.bf16.mxu0 0
    %279 = vmatpush1.bf16.msra.mxu0 %v248
    %280 = vmatprep.subr.bf16.mxu0 0
    %281 = vmatpush2.bf16.msra.mxu0 0
    %282 = vmatprep.subr.bf16.mxu0 0
    %283 = vmatpush2.bf16.msra.mxu0 0
    %284 = vmatprep.subr.bf16.mxu0 0
    %285 = vmatpush2.bf16.msra.mxu0 0
    %286 = vmatprep.subr.bf16.mxu0 0
    %287 = vmatpush2.bf16.msra.mxu0 0
    %288 = vmatprep.subr.bf16.mxu0 0
    %289 = vmatpush2.bf16.msra.mxu0 0
    %290 = vmatprep.subr.bf16.mxu0 0
    %291 = vmatpush2.bf16.msra.mxu0 0
    %292 = vmatprep.subr.bf16.mxu0 0
    %293 = vmatpush2.bf16.msra.mxu0 0
    %294 = vmatprep.subr.bf16.mxu0 0
    %295 = vmatpush2.bf16.msra.mxu0 0
    %296 = vmatprep.mubr.bf16.mxu0 0
    %297 = vmatmul.mubr.bf16.gmra.mxu0 %v184
    %v298 = vpop.f32.mrf.mxu0
    %v299 = vadd.f32 %v119, %v298
    %v300 = vpop.f32.mrf.mxu0
    %v301 = vpop.f32.mrf.mxu0
    %v302 = vadd.f32 %v119, %v301
    %v303 = vpop.f32.mrf.mxu0
    %304 = vmatprep.mubr.bf16.mxu0 0
    %305 = vmatmul.mubr.bf16.gmra.mxu0 %v185
    %v306 = vpop.f32.mrf.mxu0
    %v307 = vadd.f32 %v119, %v306
    %v308 = vpop.f32.mrf.mxu0
    %v309 = vpop.f32.mrf.mxu0
    %v310 = vadd.f32 %v119, %v309
    %v311 = vpop.f32.mrf.mxu0
    %312 = vmatprep.mubr.bf16.mxu0 0
    %313 = vmatmul.mubr.bf16.gmra.mxu0 %v186
    %v314 = vpop.f32.mrf.mxu0
    %v315 = vadd.f32 %v119, %v314
    %v316 = vpop.f32.mrf.mxu0
    %v317 = vpop.f32.mrf.mxu0
    %v318 = vadd.f32 %v119, %v317
    %v319 = vpop.f32.mrf.mxu0
    %320 = vmatprep.mubr.bf16.mxu0 0
    %321 = vmatmul.mubr.bf16.gmra.mxu0 %v187
    %v322 = vpop.f32.mrf.mxu0
    %v323 = vadd.f32 %v119, %v322
    %v324 = vpop.f32.mrf.mxu0
    %v325 = vpop.f32.mrf.mxu0
    %v326 = vadd.f32 %v119, %v325
    %v327 = vpop.f32.mrf.mxu0
    %328 = vmatprep.mubr.bf16.mxu0 0
    %329 = vmatmul.mubr.bf16.gmra.mxu0 %v188
    %v330 = vpop.f32.mrf.mxu0
    %v331 = vadd.f32 %v119, %v330
    %v332 = vpop.f32.mrf.mxu0
    %v333 = vpop.f32.mrf.mxu0
    %v334 = vadd.f32 %v119, %v333
    %v335 = vpop.f32.mrf.mxu0
    %336 = vmatprep.mubr.bf16.mxu0 0
    %337 = vmatmul.mubr.bf16.gmra.mxu0 %v189
    %v338 = vpop.f32.mrf.mxu0
    %v339 = vadd.f32 %v119, %v338
    %v340 = vpop.f32.mrf.mxu0
    %v341 = vpop.f32.mrf.mxu0
    %v342 = vadd.f32 %v119, %v341
    %v343 = vpop.f32.mrf.mxu0
    %344 = vmatprep.mubr.bf16.mxu0 0
    %345 = vmatmul.mubr.bf16.gmra.mxu0 %v190
    %v346 = vpop.f32.mrf.mxu0
    %v347 = vadd.f32 %v119, %v346
    %v348 = vpop.f32.mrf.mxu0
    %v349 = vpop.f32.mrf.mxu0
    %v350 = vadd.f32 %v119, %v349
    %v351 = vpop.f32.mrf.mxu0
    %352 = vmatprep.mubr.bf16.mxu0 0
    %353 = vmatmul.mubr.bf16.gmra.mxu0 %v191
    %v354 = vpop.f32.mrf.mxu0
    %v355 = vadd.f32 %v119, %v354
    %v356 = vpop.f32.mrf.mxu0
    %v357 = vpop.f32.mrf.mxu0
    %v358 = vadd.f32 %v119, %v357
    %v359 = vpop.f32.mrf.mxu0
    %360 = vmatprep.mubr.bf16.mxu0 0
    %361 = vmatmul.mubr.bf16.gmra.mxu0 %v192
    %v362 = vpop.f32.mrf.mxu0
    %v363 = vadd.f32 %v119, %v362
    %v364 = vpop.f32.mrf.mxu0
    %v365 = vpop.f32.mrf.mxu0
    %v366 = vadd.f32 %v119, %v365
    %v367 = vpop.f32.mrf.mxu0
    %368 = vmatprep.mubr.bf16.mxu0 0
    %369 = vmatmul.mubr.bf16.gmra.mxu0 %v193
    %v370 = vpop.f32.mrf.mxu0
    %v371 = vadd.f32 %v119, %v370
    %v372 = vpop.f32.mrf.mxu0
    %v373 = vpop.f32.mrf.mxu0
    %v374 = vadd.f32 %v119, %v373
    %v375 = vpop.f32.mrf.mxu0
    %376 = vmatprep.mubr.bf16.mxu0 0
    %377 = vmatmul.mubr.bf16.gmra.mxu0 %v194
    %v378 = vpop.f32.mrf.mxu0
    %v379 = vadd.f32 %v119, %v378
    %v380 = vpop.f32.mrf.mxu0
    %v381 = vpop.f32.mrf.mxu0
    %v382 = vadd.f32 %v119, %v381
    %v383 = vpop.f32.mrf.mxu0
    %384 = vmatprep.mubr.bf16.mxu0 0
    %385 = vmatmul.mubr.bf16.gmra.mxu0 %v195
    %v386 = vpop.f32.mrf.mxu0
    %v387 = vadd.f32 %v119, %v386
    %v388 = vpop.f32.mrf.mxu0
    %v389 = vpop.f32.mrf.mxu0
    %v390 = vadd.f32 %v119, %v389
    %v391 = vpop.f32.mrf.mxu0
    %392 = vmatprep.mubr.bf16.mxu0 0
    %393 = vmatmul.mubr.bf16.gmra.mxu0 %v196
    %v394 = vpop.f32.mrf.mxu0
    %v395 = vadd.f32 %v119, %v394
    %v396 = vpop.f32.mrf.mxu0
    %v397 = vpop.f32.mrf.mxu0
    %v398 = vadd.f32 %v119, %v397
    %v399 = vpop.f32.mrf.mxu0
    %400 = vmatprep.mubr.bf16.mxu0 0
    %401 = vmatmul.mubr.bf16.gmra.mxu0 %v197
    %v402 = vpop.f32.mrf.mxu0
    %v403 = vadd.f32 %v119, %v402
    %v404 = vpop.f32.mrf.mxu0
    %v405 = vpop.f32.mrf.mxu0
    %v406 = vadd.f32 %v119, %v405
    %v407 = vpop.f32.mrf.mxu0
    %408 = vmatprep.mubr.bf16.mxu0 0
    %409 = vmatmul.mubr.bf16.gmra.mxu0 %v198
    %v410 = vpop.f32.mrf.mxu0
    %v411 = vadd.f32 %v119, %v410
    %v412 = vpop.f32.mrf.mxu0
    %v413 = vpop.f32.mrf.mxu0
    %v414 = vadd.f32 %v119, %v413
    %v415 = vpop.f32.mrf.mxu0
    %416 = vmatprep.mubr.bf16.mxu0 0
    %417 = vmatmul.mubr.bf16.gmra.mxu0 %v199
    %v418 = vpop.f32.mrf.mxu0
    %v419 = vadd.f32 %v119, %v418
    %v420 = vpop.f32.mrf.mxu0
    %v421 = vpop.f32.mrf.mxu0
    %v422 = vadd.f32 %v119, %v421
    %v423 = vpop.f32.mrf.mxu0
    %424 = vdwg.mxu0
    %v425 = vadd.f32 %v299, %v315
    %v426 = vadd.f32 %v425, %v331
    %v427 = vadd.f32 %v426, %v347
    %v428 = vadd.f32 %v427, %v363
    %v429 = vadd.f32 %v428, %v379
    %v430 = vadd.f32 %v429, %v395
    %v431 = vadd.f32 %v430, %v411
    %432 = vadd.xlane.f32.xlu0 %v431
    %v433 = vpop.xlane.xlu0 %432
    %v434 = vadd.f32 %v302, %v318
    %v435 = vadd.f32 %v434, %v334
    %v436 = vadd.f32 %v435, %v350
    %v437 = vadd.f32 %v436, %v366
    %v438 = vadd.f32 %v437, %v382
    %v439 = vadd.f32 %v438, %v398
    %v440 = vadd.f32 %v439, %v414
    %441 = vadd.xlane.f32.xlu0 %v440
    %v442 = vpop.xlane.xlu0 %441
    %v443 = vadd.f32 %v307, %v323
    %v444 = vadd.f32 %v443, %v339
    %v445 = vadd.f32 %v444, %v355
    %v446 = vadd.f32 %v445, %v371
    %v447 = vadd.f32 %v446, %v387
    %v448 = vadd.f32 %v447, %v403
    %v449 = vadd.f32 %v448, %v419
    %450 = vadd.xlane.f32.xlu0 %v449
    %v451 = vpop.xlane.xlu0 %450
    %v452 = vadd.f32 %v310, %v326
    %v453 = vadd.f32 %v452, %v342
    %v454 = vadd.f32 %v453, %v358
    %v455 = vadd.f32 %v454, %v374
    %v456 = vadd.f32 %v455, %v390
    %v457 = vadd.f32 %v456, %v406
    %v458 = vadd.f32 %v457, %v422
    %459 = vadd.xlane.f32.xlu0 %v458
    %v460 = vpop.xlane.xlu0 %459
    %v461 = vmul.f32 %v299, %v299
    %v462 = vmul.f32 %v302, %v302
    %v463 = vmul.f32 %v307, %v307
    %v464 = vmul.f32 %v310, %v310
    %v465 = vmul.f32 %v315, %v315
    %v466 = vmul.f32 %v318, %v318
    %v467 = vmul.f32 %v323, %v323
    %v468 = vmul.f32 %v326, %v326
    %v469 = vmul.f32 %v331, %v331
    %v470 = vmul.f32 %v334, %v334
    %v471 = vmul.f32 %v339, %v339
    %v472 = vmul.f32 %v342, %v342
    %v473 = vmul.f32 %v347, %v347
    %v474 = vmul.f32 %v350, %v350
    %v475 = vmul.f32 %v355, %v355
    %v476 = vmul.f32 %v358, %v358
    %v477 = vmul.f32 %v363, %v363
    %v478 = vmul.f32 %v366, %v366
    %v479 = vmul.f32 %v371, %v371
    %v480 = vmul.f32 %v374, %v374
    %v481 = vmul.f32 %v379, %v379
    %v482 = vmul.f32 %v382, %v382
    %v483 = vmul.f32 %v387, %v387
    %v484 = vmul.f32 %v390, %v390
    %v485 = vmul.f32 %v395, %v395
    %v486 = vmul.f32 %v398, %v398
    %v487 = vmul.f32 %v403, %v403
    %v488 = vmul.f32 %v406, %v406
    %v489 = vmul.f32 %v411, %v411
    %v490 = vmul.f32 %v414, %v414
    %v491 = vmul.f32 %v419, %v419
    %v492 = vmul.f32 %v422, %v422
    %v493 = vadd.f32 %v461, %v465
    %v494 = vadd.f32 %v493, %v469
    %v495 = vadd.f32 %v494, %v473
    %v496 = vadd.f32 %v495, %v477
    %v497 = vadd.f32 %v496, %v481
    %v498 = vadd.f32 %v497, %v485
    %v499 = vadd.f32 %v498, %v489
    %500 = vadd.xlane.f32.xlu0 %v499
    %v501 = vpop.xlane.xlu0 %500
    %v502 = vadd.f32 %v462, %v466
    %v503 = vadd.f32 %v502, %v470
    %v504 = vadd.f32 %v503, %v474
    %v505 = vadd.f32 %v504, %v478
    %v506 = vadd.f32 %v505, %v482
    %v507 = vadd.f32 %v506, %v486
    %v508 = vadd.f32 %v507, %v490
    %509 = vadd.xlane.f32.xlu0 %v508
    %v510 = vpop.xlane.xlu0 %509
    %v511 = vadd.f32 %v463, %v467
    %v512 = vadd.f32 %v511, %v471
    %v513 = vadd.f32 %v512, %v475
    %v514 = vadd.f32 %v513, %v479
    %v515 = vadd.f32 %v514, %v483
    %v516 = vadd.f32 %v515, %v487
    %v517 = vadd.f32 %v516, %v491
    %518 = vadd.xlane.f32.xlu0 %v517
    %v519 = vpop.xlane.xlu0 %518
    %v520 = vadd.f32 %v464, %v468
    %v521 = vadd.f32 %v520, %v472
    %v522 = vadd.f32 %v521, %v476
    %v523 = vadd.f32 %v522, %v480
    %v524 = vadd.f32 %v523, %v484
    %v525 = vadd.f32 %v524, %v488
    %v526 = vadd.f32 %v525, %v492
    %527 = vadd.xlane.f32.xlu0 %v526
    %v528 = vpop.xlane.xlu0 %527
    %v529 = vmul.f32 %v433, 0.0009765625
    %v530 = vmul.f32 %v442, 0.0009765625
    %v531 = vmul.f32 %v451, 0.0009765625
    %v532 = vmul.f32 %v460, 0.0009765625
    %v533 = vmul.f32 %v501, 0.0009765625
    %v534 = vmul.f32 %v510, 0.0009765625
    %v535 = vmul.f32 %v519, 0.0009765625
    %v536 = vmul.f32 %v528, 0.0009765625
    %v537 = vmul.f32 %v529, %v529
    %v538 = vmul.f32 %v530, %v530
    %v539 = vmul.f32 %v531, %v531
    %v540 = vmul.f32 %v532, %v532
    %v541 = vsub.f32 %v533, %v537
    %v542 = vsub.f32 %v534, %v538
    %v543 = vsub.f32 %v535, %v539
    %v544 = vsub.f32 %v536, %v540
    %v545 = vmax.f32 %v541, 0.0
    %v546 = vmax.f32 %v542, 0.0
    %v547 = vmax.f32 %v543, 0.0
    %v548 = vmax.f32 %v544, 0.0
    %v549 = vadd.f32 %v545, 1e-05
    %v550 = vadd.f32 %v546, 1e-05
    %v551 = vadd.f32 %v547, 1e-05
    %v552 = vadd.f32 %v548, 1e-05
    %v553 = vrsqrt.pop %v549
    %v554 = vrsqrt.pop %v550
    %v555 = vrsqrt.pop %v551
    %v556 = vrsqrt.pop %v552
    %v557 = vmul.f32 %v63, %v553
    %v558 = vmul.f32 %v64, %v554
    %v559 = vmul.f32 %v65, %v555
    %v560 = vmul.f32 %v66, %v556
    %v561 = vmul.f32 %v529, %v557
    %v562 = vmul.f32 %v530, %v558
    %v563 = vmul.f32 %v531, %v559
    %v564 = vmul.f32 %v532, %v560
    %569 = vrot.lane.b32.xlu0 %v561, 1
    %v570 = vpop.permute.xlu0 %569
    %571 = vrot.lane.b32.xlu0 %v562, 1
    %v572 = vpop.permute.xlu0 %571
    %573 = vrot.lane.b32.xlu0 %v563, 1
    %v574 = vpop.permute.xlu0 %573
    %575 = vrot.lane.b32.xlu0 %v564, 1
    %v576 = vpop.permute.xlu0 %575
    %v581 = vsub.f32 %v63, %v570
    %v582 = vsub.f32 %v64, %v572
    %v583 = vsub.f32 %v65, %v574
    %v584 = vsub.f32 %v66, %v576
    %586 = vset.pattern.permute.xlu0 0
    %587 = vperm.xlu0 %586, %v557
    %v588 = vpop.permute.xlu0 %587
    %591 = vset.pattern.permute.xlu0 0
    %592 = vperm.xlu0 %591, %v558
    %v593 = vpop.permute.xlu0 %592
    %596 = vset.pattern.permute.xlu0 0
    %597 = vperm.xlu0 %596, %v559
    %v598 = vpop.permute.xlu0 %597
    %601 = vset.pattern.permute.xlu0 0
    %602 = vperm.xlu0 %601, %v560
    %v603 = vpop.permute.xlu0 %602
    %v605 = vmul.f32 %v299, %v588
    %v606 = vmul.f32 %v302, %v593
    %v607 = vmul.f32 %v307, %v598
    %v608 = vmul.f32 %v310, %v603
    %v609 = vmul.f32 %v315, %v588
    %v610 = vmul.f32 %v318, %v593
    %v611 = vmul.f32 %v323, %v598
    %v612 = vmul.f32 %v326, %v603
    %v613 = vmul.f32 %v331, %v588
    %v614 = vmul.f32 %v334, %v593
    %v615 = vmul.f32 %v339, %v598
    %v616 = vmul.f32 %v342, %v603
    %v617 = vmul.f32 %v347, %v588
    %v618 = vmul.f32 %v350, %v593
    %v619 = vmul.f32 %v355, %v598
    %v620 = vmul.f32 %v358, %v603
    %v621 = vmul.f32 %v363, %v588
    %v622 = vmul.f32 %v366, %v593
    %v623 = vmul.f32 %v371, %v598
    %v624 = vmul.f32 %v374, %v603
    %v625 = vmul.f32 %v379, %v588
    %v626 = vmul.f32 %v382, %v593
    %v627 = vmul.f32 %v387, %v598
    %v628 = vmul.f32 %v390, %v603
    %v629 = vmul.f32 %v395, %v588
    %v630 = vmul.f32 %v398, %v593
    %v631 = vmul.f32 %v403, %v598
    %v632 = vmul.f32 %v406, %v603
    %v633 = vmul.f32 %v411, %v588
    %v634 = vmul.f32 %v414, %v593
    %v635 = vmul.f32 %v419, %v598
    %v636 = vmul.f32 %v422, %v603
    %638 = vset.pattern.permute.xlu0 1
    %639 = vperm.xlu0 %638, %v581
    %v640 = vpop.permute.xlu0 %639
    %643 = vset.pattern.permute.xlu0 1
    %644 = vperm.xlu0 %643, %v582
    %v645 = vpop.permute.xlu0 %644
    %648 = vset.pattern.permute.xlu0 1
    %649 = vperm.xlu0 %648, %v583
    %v650 = vpop.permute.xlu0 %649
    %653 = vset.pattern.permute.xlu0 1
    %654 = vperm.xlu0 %653, %v584
    %v655 = vpop.permute.xlu0 %654
    %v657 = vadd.f32 %v605, %v640
    %v658 = vadd.f32 %v606, %v645
    %v659 = vadd.f32 %v607, %v650
    %v660 = vadd.f32 %v608, %v655
    %v661 = vadd.f32 %v609, %v640
    %v662 = vadd.f32 %v610, %v645
    %v663 = vadd.f32 %v611, %v650
    %v664 = vadd.f32 %v612, %v655
    %v665 = vadd.f32 %v613, %v640
    %v666 = vadd.f32 %v614, %v645
    %v667 = vadd.f32 %v615, %v650
    %v668 = vadd.f32 %v616, %v655
    %v669 = vadd.f32 %v617, %v640
    %v670 = vadd.f32 %v618, %v645
    %v671 = vadd.f32 %v619, %v650
    %v672 = vadd.f32 %v620, %v655
    %v673 = vadd.f32 %v621, %v640
    %v674 = vadd.f32 %v622, %v645
    %v675 = vadd.f32 %v623, %v650
    %v676 = vadd.f32 %v624, %v655
    %v677 = vadd.f32 %v625, %v640
    %v678 = vadd.f32 %v626, %v645
    %v679 = vadd.f32 %v627, %v650
    %v680 = vadd.f32 %v628, %v655
    %v681 = vadd.f32 %v629, %v640
    %v682 = vadd.f32 %v630, %v645
    %v683 = vadd.f32 %v631, %v650
    %v684 = vadd.f32 %v632, %v655
    %v685 = vadd.f32 %v633, %v640
    %v686 = vadd.f32 %v634, %v645
    %v687 = vadd.f32 %v635, %v650
    %v688 = vadd.f32 %v636, %v655
    %v689 = vmax.f32 %v657, 0.0
    %v690 = vmax.f32 %v658, 0.0
    %v691 = vmax.f32 %v659, 0.0
    %v692 = vmax.f32 %v660, 0.0
    %v693 = vmax.f32 %v661, 0.0
    %v694 = vmax.f32 %v662, 0.0
    %v695 = vmax.f32 %v663, 0.0
    %v696 = vmax.f32 %v664, 0.0
    %v697 = vmax.f32 %v665, 0.0
    %v698 = vmax.f32 %v666, 0.0
    %v699 = vmax.f32 %v667, 0.0
    %v700 = vmax.f32 %v668, 0.0
    %v701 = vmax.f32 %v669, 0.0
    %v702 = vmax.f32 %v670, 0.0
    %v703 = vmax.f32 %v671, 0.0
    %v704 = vmax.f32 %v672, 0.0
    %v705 = vmax.f32 %v673, 0.0
    %v706 = vmax.f32 %v674, 0.0
    %v707 = vmax.f32 %v675, 0.0
    %v708 = vmax.f32 %v676, 0.0
    %v709 = vmax.f32 %v677, 0.0
    %v710 = vmax.f32 %v678, 0.0
    %v711 = vmax.f32 %v679, 0.0
    %v712 = vmax.f32 %v680, 0.0
    %v713 = vmax.f32 %v681, 0.0
    %v714 = vmax.f32 %v682, 0.0
    %v715 = vmax.f32 %v683, 0.0
    %v716 = vmax.f32 %v684, 0.0
    %v717 = vmax.f32 %v685, 0.0
    %v718 = vmax.f32 %v686, 0.0
    %v719 = vmax.f32 %v687, 0.0
    %v720 = vmax.f32 %v688, 0.0
    %v721 = vpack.c.bf16 %v690, %v689
    %v722 = vpack.c.bf16 %v692, %v691
    %v723 = vpack.c.bf16 %v694, %v693
    %v724 = vpack.c.bf16 %v696, %v695
    %v725 = vpack.c.bf16 %v698, %v697
    %v726 = vpack.c.bf16 %v700, %v699
    %v727 = vpack.c.bf16 %v702, %v701
    %v728 = vpack.c.bf16 %v704, %v703
    %v729 = vpack.c.bf16 %v706, %v705
    %v730 = vpack.c.bf16 %v708, %v707
    %v731 = vpack.c.bf16 %v710, %v709
    %v732 = vpack.c.bf16 %v712, %v711
    %v733 = vpack.c.bf16 %v714, %v713
    %v734 = vpack.c.bf16 %v716, %v715
    %v735 = vpack.c.bf16 %v718, %v717
    %v736 = vpack.c.bf16 %v720, %v719
    %v737 = vld [vmem:[#allocation7] sm:$0xf]
    %v738 = vld [vmem:[#allocation7 + $0x4] sm:$0xf]
    %v739 = vld [vmem:[#allocation7 + $0x8] sm:$0xf]
    %v740 = vld [vmem:[#allocation7 + $0xc] sm:$0xf]
    %v741 = vld [vmem:[#allocation7 + $0x10] sm:$0xf]
    %v742 = vld [vmem:[#allocation7 + $0x14] sm:$0xf]
    %v743 = vld [vmem:[#allocation7 + $0x18] sm:$0xf]
    %v744 = vld [vmem:[#allocation7 + $0x1c] sm:$0xf]
    %v745 = vld [vmem:[#allocation7 + $0x20] sm:$0xf]
    %v746 = vld [vmem:[#allocation7 + $0x24] sm:$0xf]
    %v747 = vld [vmem:[#allocation7 + $0x28] sm:$0xf]
    %v748 = vld [vmem:[#allocation7 + $0x2c] sm:$0xf]
    %v749 = vld [vmem:[#allocation7 + $0x30] sm:$0xf]
    %v750 = vld [vmem:[#allocation7 + $0x34] sm:$0xf]
    %v751 = vld [vmem:[#allocation7 + $0x38] sm:$0xf]
    %v752 = vld [vmem:[#allocation7 + $0x3c] sm:$0xf]
    %v753 = vlaneseq
    %v754 = vshrl.u32 %v753, 7
    %v755 = vsub.s32 1, %v754
    %v756 = vrot.slane %v67, %v755
    %v773 = vunpack.c.l.b16 %v737
    %v774 = vunpack.c.l.b16 %v738
    %v775 = vunpack.c.l.b16 %v739
    %v776 = vunpack.c.l.b16 %v740
    %v777 = vunpack.c.l.b16 %v741
    %v778 = vunpack.c.l.b16 %v742
    %v779 = vunpack.c.l.b16 %v743
    %v780 = vunpack.c.l.b16 %v744
    %v781 = vunpack.c.l.b16 %v745
    %v782 = vunpack.c.l.b16 %v746
    %v783 = vunpack.c.l.b16 %v747
    %v784 = vunpack.c.l.b16 %v748
    %v785 = vunpack.c.l.b16 %v749
    %v786 = vunpack.c.l.b16 %v750
    %v787 = vunpack.c.l.b16 %v751
    %v788 = vunpack.c.l.b16 %v752
    %v789 = vpack.c.b16 %v774, %v773
    %v790 = vpack.c.b16 %v776, %v775
    %v791 = vpack.c.b16 %v778, %v777
    %v792 = vpack.c.b16 %v780, %v779
    %v793 = vpack.c.b16 %v782, %v781
    %v794 = vpack.c.b16 %v784, %v783
    %v795 = vpack.c.b16 %v786, %v785
    %v796 = vpack.c.b16 %v788, %v787
    %805 = vmatprep.subr.bf16.mxu0 0
    %806 = vmatpush1.bf16.msra.mxu0 %v796
    %807 = vmatprep.subr.bf16.mxu0 0
    %808 = vmatpush1.bf16.msra.mxu0 %v795
    %809 = vmatprep.subr.bf16.mxu0 0
    %810 = vmatpush1.bf16.msra.mxu0 %v794
    %811 = vmatprep.subr.bf16.mxu0 0
    %812 = vmatpush1.bf16.msra.mxu0 %v793
    %813 = vmatprep.subr.bf16.mxu0 0
    %814 = vmatpush1.bf16.msra.mxu0 %v792
    %815 = vmatprep.subr.bf16.mxu0 0
    %816 = vmatpush1.bf16.msra.mxu0 %v791
    %817 = vmatprep.subr.bf16.mxu0 0
    %818 = vmatpush1.bf16.msra.mxu0 %v790
    %819 = vmatprep.subr.bf16.mxu0 0
    %820 = vmatpush1.bf16.msra.mxu0 %v789
    %821 = vmatprep.subr.bf16.mxu0 0
    %822 = vmatpush2.bf16.msra.mxu0 0
    %823 = vmatprep.subr.bf16.mxu0 0
    %824 = vmatpush2.bf16.msra.mxu0 0
    %825 = vmatprep.subr.bf16.mxu0 0
    %826 = vmatpush2.bf16.msra.mxu0 0
    %827 = vmatprep.subr.bf16.mxu0 0
    %828 = vmatpush2.bf16.msra.mxu0 0
    %829 = vmatprep.subr.bf16.mxu0 0
    %830 = vmatpush2.bf16.msra.mxu0 0
    %831 = vmatprep.subr.bf16.mxu0 0
    %832 = vmatpush2.bf16.msra.mxu0 0
    %833 = vmatprep.subr.bf16.mxu0 0
    %834 = vmatpush2.bf16.msra.mxu0 0
    %835 = vmatprep.subr.bf16.mxu0 0
    %836 = vmatpush2.bf16.msra.mxu0 0
    %837 = vmatprep.mubr.bf16.mxu0 0
    %838 = vmatmul.mubr.bf16.gmra.mxu0 %v721
    %v839 = vpop.f32.mrf.mxu0
    %v840 = vadd.f32 %v756, %v839
    %v841 = vpop.f32.mrf.mxu0
    %v842 = vpop.f32.mrf.mxu0
    %v843 = vadd.f32 %v756, %v842
    %v844 = vpop.f32.mrf.mxu0
    %845 = vmatprep.mubr.bf16.mxu0 0
    %846 = vmatmul.mubr.bf16.gmra.mxu0 %v722
    %v847 = vpop.f32.mrf.mxu0
    %v848 = vadd.f32 %v756, %v847
    %v849 = vpop.f32.mrf.mxu0
    %v850 = vpop.f32.mrf.mxu0
    %v851 = vadd.f32 %v756, %v850
    %v852 = vpop.f32.mrf.mxu0
    %853 = vmatprep.mubr.bf16.mxu0 0
    %854 = vmatmul.mubr.bf16.gmra.mxu0 %v723
    %v855 = vpop.f32.mrf.mxu0
    %v856 = vadd.f32 %v756, %v855
    %v857 = vpop.f32.mrf.mxu0
    %v858 = vpop.f32.mrf.mxu0
    %v859 = vadd.f32 %v756, %v858
    %v860 = vpop.f32.mrf.mxu0
    %861 = vmatprep.mubr.bf16.mxu0 0
    %862 = vmatmul.mubr.bf16.gmra.mxu0 %v724
    %v863 = vpop.f32.mrf.mxu0
    %v864 = vadd.f32 %v756, %v863
    %v865 = vpop.f32.mrf.mxu0
    %v866 = vpop.f32.mrf.mxu0
    %v867 = vadd.f32 %v756, %v866
    %v868 = vpop.f32.mrf.mxu0
    %869 = vmatprep.mubr.bf16.mxu0 0
    %870 = vmatmul.mubr.bf16.gmra.mxu0 %v725
    %v871 = vpop.f32.mrf.mxu0
    %v872 = vadd.f32 %v756, %v871
    %v873 = vpop.f32.mrf.mxu0
    %v874 = vpop.f32.mrf.mxu0
    %v875 = vadd.f32 %v756, %v874
    %v876 = vpop.f32.mrf.mxu0
    %877 = vmatprep.mubr.bf16.mxu0 0
    %878 = vmatmul.mubr.bf16.gmra.mxu0 %v726
    %v879 = vpop.f32.mrf.mxu0
    %v880 = vadd.f32 %v756, %v879
    %v881 = vpop.f32.mrf.mxu0
    %v882 = vpop.f32.mrf.mxu0
    %v883 = vadd.f32 %v756, %v882
    %v884 = vpop.f32.mrf.mxu0
    %885 = vmatprep.mubr.bf16.mxu0 0
    %886 = vmatmul.mubr.bf16.gmra.mxu0 %v727
    %v887 = vpop.f32.mrf.mxu0
    %v888 = vadd.f32 %v756, %v887
    %v889 = vpop.f32.mrf.mxu0
    %v890 = vpop.f32.mrf.mxu0
    %v891 = vadd.f32 %v756, %v890
    %v892 = vpop.f32.mrf.mxu0
    %893 = vmatprep.mubr.bf16.mxu0 0
    %894 = vmatmul.mubr.bf16.gmra.mxu0 %v728
    %v895 = vpop.f32.mrf.mxu0
    %v896 = vadd.f32 %v756, %v895
    %v897 = vpop.f32.mrf.mxu0
    %v898 = vpop.f32.mrf.mxu0
    %v899 = vadd.f32 %v756, %v898
    %v900 = vpop.f32.mrf.mxu0
    %901 = vmatprep.mubr.bf16.mxu0 0
    %902 = vmatmul.mubr.bf16.gmra.mxu0 %v729
    %v903 = vpop.f32.mrf.mxu0
    %v904 = vadd.f32 %v756, %v903
    %v905 = vpop.f32.mrf.mxu0
    %v906 = vpop.f32.mrf.mxu0
    %v907 = vadd.f32 %v756, %v906
    %v908 = vpop.f32.mrf.mxu0
    %909 = vmatprep.mubr.bf16.mxu0 0
    %910 = vmatmul.mubr.bf16.gmra.mxu0 %v730
    %v911 = vpop.f32.mrf.mxu0
    %v912 = vadd.f32 %v756, %v911
    %v913 = vpop.f32.mrf.mxu0
    %v914 = vpop.f32.mrf.mxu0
    %v915 = vadd.f32 %v756, %v914
    %v916 = vpop.f32.mrf.mxu0
    %917 = vmatprep.mubr.bf16.mxu0 0
    %918 = vmatmul.mubr.bf16.gmra.mxu0 %v731
    %v919 = vpop.f32.mrf.mxu0
    %v920 = vadd.f32 %v756, %v919
    %v921 = vpop.f32.mrf.mxu0
    %v922 = vpop.f32.mrf.mxu0
    %v923 = vadd.f32 %v756, %v922
    %v924 = vpop.f32.mrf.mxu0
    %925 = vmatprep.mubr.bf16.mxu0 0
    %926 = vmatmul.mubr.bf16.gmra.mxu0 %v732
    %v927 = vpop.f32.mrf.mxu0
    %v928 = vadd.f32 %v756, %v927
    %v929 = vpop.f32.mrf.mxu0
    %v930 = vpop.f32.mrf.mxu0
    %v931 = vadd.f32 %v756, %v930
    %v932 = vpop.f32.mrf.mxu0
    %933 = vmatprep.mubr.bf16.mxu0 0
    %934 = vmatmul.mubr.bf16.gmra.mxu0 %v733
    %v935 = vpop.f32.mrf.mxu0
    %v936 = vadd.f32 %v756, %v935
    %v937 = vpop.f32.mrf.mxu0
    %v938 = vpop.f32.mrf.mxu0
    %v939 = vadd.f32 %v756, %v938
    %v940 = vpop.f32.mrf.mxu0
    %941 = vmatprep.mubr.bf16.mxu0 0
    %942 = vmatmul.mubr.bf16.gmra.mxu0 %v734
    %v943 = vpop.f32.mrf.mxu0
    %v944 = vadd.f32 %v756, %v943
    %v945 = vpop.f32.mrf.mxu0
    %v946 = vpop.f32.mrf.mxu0
    %v947 = vadd.f32 %v756, %v946
    %v948 = vpop.f32.mrf.mxu0
    %949 = vmatprep.mubr.bf16.mxu0 0
    %950 = vmatmul.mubr.bf16.gmra.mxu0 %v735
    %v951 = vpop.f32.mrf.mxu0
    %v952 = vadd.f32 %v756, %v951
    %v953 = vpop.f32.mrf.mxu0
    %v954 = vpop.f32.mrf.mxu0
    %v955 = vadd.f32 %v756, %v954
    %v956 = vpop.f32.mrf.mxu0
    %957 = vmatprep.mubr.bf16.mxu0 0
    %958 = vmatmul.mubr.bf16.gmra.mxu0 %v736
    %v959 = vpop.f32.mrf.mxu0
    %v960 = vadd.f32 %v756, %v959
    %v961 = vpop.f32.mrf.mxu0
    %v962 = vpop.f32.mrf.mxu0
    %v963 = vadd.f32 %v756, %v962
    %v964 = vpop.f32.mrf.mxu0
    %965 = vdwg.mxu0
    %v966 = vadd.f32 %v840, %v856
    %v967 = vadd.f32 %v966, %v872
    %v968 = vadd.f32 %v967, %v888
    %v969 = vadd.f32 %v968, %v904
    %v970 = vadd.f32 %v969, %v920
    %v971 = vadd.f32 %v970, %v936
    %v972 = vadd.f32 %v971, %v952
    %973 = vadd.xlane.f32.xlu0 %v972
    %v974 = vpop.xlane.xlu0 %973
    %v975 = vadd.f32 %v843, %v859
    %v976 = vadd.f32 %v975, %v875
    %v977 = vadd.f32 %v976, %v891
    %v978 = vadd.f32 %v977, %v907
    %v979 = vadd.f32 %v978, %v923
    %v980 = vadd.f32 %v979, %v939
    %v981 = vadd.f32 %v980, %v955
    %982 = vadd.xlane.f32.xlu0 %v981
    %v983 = vpop.xlane.xlu0 %982
    %v984 = vadd.f32 %v848, %v864
    %v985 = vadd.f32 %v984, %v880
    %v986 = vadd.f32 %v985, %v896
    %v987 = vadd.f32 %v986, %v912
    %v988 = vadd.f32 %v987, %v928
    %v989 = vadd.f32 %v988, %v944
    %v990 = vadd.f32 %v989, %v960
    %991 = vadd.xlane.f32.xlu0 %v990
    %v992 = vpop.xlane.xlu0 %991
    %v993 = vadd.f32 %v851, %v867
    %v994 = vadd.f32 %v993, %v883
    %v995 = vadd.f32 %v994, %v899
    %v996 = vadd.f32 %v995, %v915
    %v997 = vadd.f32 %v996, %v931
    %v998 = vadd.f32 %v997, %v947
    %v999 = vadd.f32 %v998, %v963
    %1000 = vadd.xlane.f32.xlu0 %v999
    %v1001 = vpop.xlane.xlu0 %1000
    %v1002 = vmul.f32 %v840, %v840
    %v1003 = vmul.f32 %v843, %v843
    %v1004 = vmul.f32 %v848, %v848
    %v1005 = vmul.f32 %v851, %v851
    %v1006 = vmul.f32 %v856, %v856
    %v1007 = vmul.f32 %v859, %v859
    %v1008 = vmul.f32 %v864, %v864
    %v1009 = vmul.f32 %v867, %v867
    %v1010 = vmul.f32 %v872, %v872
    %v1011 = vmul.f32 %v875, %v875
    %v1012 = vmul.f32 %v880, %v880
    %v1013 = vmul.f32 %v883, %v883
    %v1014 = vmul.f32 %v888, %v888
    %v1015 = vmul.f32 %v891, %v891
    %v1016 = vmul.f32 %v896, %v896
    %v1017 = vmul.f32 %v899, %v899
    %v1018 = vmul.f32 %v904, %v904
    %v1019 = vmul.f32 %v907, %v907
    %v1020 = vmul.f32 %v912, %v912
    %v1021 = vmul.f32 %v915, %v915
    %v1022 = vmul.f32 %v920, %v920
    %v1023 = vmul.f32 %v923, %v923
    %v1024 = vmul.f32 %v928, %v928
    %v1025 = vmul.f32 %v931, %v931
    %v1026 = vmul.f32 %v936, %v936
    %v1027 = vmul.f32 %v939, %v939
    %v1028 = vmul.f32 %v944, %v944
    %v1029 = vmul.f32 %v947, %v947
    %v1030 = vmul.f32 %v952, %v952
    %v1031 = vmul.f32 %v955, %v955
    %v1032 = vmul.f32 %v960, %v960
    %v1033 = vmul.f32 %v963, %v963
    %v1034 = vadd.f32 %v1002, %v1006
    %v1035 = vadd.f32 %v1034, %v1010
    %v1036 = vadd.f32 %v1035, %v1014
    %v1037 = vadd.f32 %v1036, %v1018
    %v1038 = vadd.f32 %v1037, %v1022
    %v1039 = vadd.f32 %v1038, %v1026
    %v1040 = vadd.f32 %v1039, %v1030
    %1041 = vadd.xlane.f32.xlu0 %v1040
    %v1042 = vpop.xlane.xlu0 %1041
    %v1043 = vadd.f32 %v1003, %v1007
    %v1044 = vadd.f32 %v1043, %v1011
    %v1045 = vadd.f32 %v1044, %v1015
    %v1046 = vadd.f32 %v1045, %v1019
    %v1047 = vadd.f32 %v1046, %v1023
    %v1048 = vadd.f32 %v1047, %v1027
    %v1049 = vadd.f32 %v1048, %v1031
    %1050 = vadd.xlane.f32.xlu0 %v1049
    %v1051 = vpop.xlane.xlu0 %1050
    %v1052 = vadd.f32 %v1004, %v1008
    %v1053 = vadd.f32 %v1052, %v1012
    %v1054 = vadd.f32 %v1053, %v1016
    %v1055 = vadd.f32 %v1054, %v1020
    %v1056 = vadd.f32 %v1055, %v1024
    %v1057 = vadd.f32 %v1056, %v1028
    %v1058 = vadd.f32 %v1057, %v1032
    %1059 = vadd.xlane.f32.xlu0 %v1058
    %v1060 = vpop.xlane.xlu0 %1059
    %v1061 = vadd.f32 %v1005, %v1009
    %v1062 = vadd.f32 %v1061, %v1013
    %v1063 = vadd.f32 %v1062, %v1017
    %v1064 = vadd.f32 %v1063, %v1021
    %v1065 = vadd.f32 %v1064, %v1025
    %v1066 = vadd.f32 %v1065, %v1029
    %v1067 = vadd.f32 %v1066, %v1033
    %1068 = vadd.xlane.f32.xlu0 %v1067
    %v1069 = vpop.xlane.xlu0 %1068
    %v1070 = vmul.f32 %v974, 0.0009765625
    %v1071 = vmul.f32 %v983, 0.0009765625
    %v1072 = vmul.f32 %v992, 0.0009765625
    %v1073 = vmul.f32 %v1001, 0.0009765625
    %v1074 = vmul.f32 %v1042, 0.0009765625
    %v1075 = vmul.f32 %v1051, 0.0009765625
    %v1076 = vmul.f32 %v1060, 0.0009765625
    %v1077 = vmul.f32 %v1069, 0.0009765625
    %v1078 = vmul.f32 %v1070, %v1070
    %v1079 = vmul.f32 %v1071, %v1071
    %v1080 = vmul.f32 %v1072, %v1072
    %v1081 = vmul.f32 %v1073, %v1073
    %v1082 = vsub.f32 %v1074, %v1078
    %v1083 = vsub.f32 %v1075, %v1079
    %v1084 = vsub.f32 %v1076, %v1080
    %v1085 = vsub.f32 %v1077, %v1081
    %v1086 = vmax.f32 %v1082, 0.0
    %v1087 = vmax.f32 %v1083, 0.0
    %v1088 = vmax.f32 %v1084, 0.0
    %v1089 = vmax.f32 %v1085, 0.0
    %v1090 = vadd.f32 %v1086, 1e-05
    %v1091 = vadd.f32 %v1087, 1e-05
    %v1092 = vadd.f32 %v1088, 1e-05
    %v1093 = vadd.f32 %v1089, 1e-05
    %v1094 = vrsqrt.pop %v1090
    %v1095 = vrsqrt.pop %v1091
    %v1096 = vrsqrt.pop %v1092
    %v1097 = vrsqrt.pop %v1093
    %v1098 = vmul.f32 %v63, %v1094
    %v1099 = vmul.f32 %v64, %v1095
    %v1100 = vmul.f32 %v65, %v1096
    %v1101 = vmul.f32 %v66, %v1097
    %v1102 = vmul.f32 %v1070, %v1098
    %v1103 = vmul.f32 %v1071, %v1099
    %v1104 = vmul.f32 %v1072, %v1100
    %v1105 = vmul.f32 %v1073, %v1101
    %1110 = vrot.lane.b32.xlu0 %v1102, 1
    %v1111 = vpop.permute.xlu0 %1110
    %1112 = vrot.lane.b32.xlu0 %v1103, 1
    %v1113 = vpop.permute.xlu0 %1112
    %1114 = vrot.lane.b32.xlu0 %v1104, 1
    %v1115 = vpop.permute.xlu0 %1114
    %1116 = vrot.lane.b32.xlu0 %v1105, 1
    %v1117 = vpop.permute.xlu0 %1116
    %v1122 = vsub.f32 %v63, %v1111
    %v1123 = vsub.f32 %v64, %v1113
    %v1124 = vsub.f32 %v65, %v1115
    %v1125 = vsub.f32 %v66, %v1117
    %1127 = vset.pattern.permute.xlu0 2
    %1128 = vperm.xlu0 %1127, %v1098
    %v1129 = vpop.permute.xlu0 %1128
    %1132 = vset.pattern.permute.xlu0 2
    %1133 = vperm.xlu0 %1132, %v1099
    %v1134 = vpop.permute.xlu0 %1133
    %1137 = vset.pattern.permute.xlu0 2
    %1138 = vperm.xlu0 %1137, %v1100
    %v1139 = vpop.permute.xlu0 %1138
    %1142 = vset.pattern.permute.xlu0 2
    %1143 = vperm.xlu0 %1142, %v1101
    %v1144 = vpop.permute.xlu0 %1143
    %v1146 = vmul.f32 %v840, %v1129
    %v1147 = vmul.f32 %v843, %v1134
    %v1148 = vmul.f32 %v848, %v1139
    %v1149 = vmul.f32 %v851, %v1144
    %v1150 = vmul.f32 %v856, %v1129
    %v1151 = vmul.f32 %v859, %v1134
    %v1152 = vmul.f32 %v864, %v1139
    %v1153 = vmul.f32 %v867, %v1144
    %v1154 = vmul.f32 %v872, %v1129
    %v1155 = vmul.f32 %v875, %v1134
    %v1156 = vmul.f32 %v880, %v1139
    %v1157 = vmul.f32 %v883, %v1144
    %v1158 = vmul.f32 %v888, %v1129
    %v1159 = vmul.f32 %v891, %v1134
    %v1160 = vmul.f32 %v896, %v1139
    %v1161 = vmul.f32 %v899, %v1144
    %v1162 = vmul.f32 %v904, %v1129
    %v1163 = vmul.f32 %v907, %v1134
    %v1164 = vmul.f32 %v912, %v1139
    %v1165 = vmul.f32 %v915, %v1144
    %v1166 = vmul.f32 %v920, %v1129
    %v1167 = vmul.f32 %v923, %v1134
    %v1168 = vmul.f32 %v928, %v1139
    %v1169 = vmul.f32 %v931, %v1144
    %v1170 = vmul.f32 %v936, %v1129
    %v1171 = vmul.f32 %v939, %v1134
    %v1172 = vmul.f32 %v944, %v1139
    %v1173 = vmul.f32 %v947, %v1144
    %v1174 = vmul.f32 %v952, %v1129
    %v1175 = vmul.f32 %v955, %v1134
    %v1176 = vmul.f32 %v960, %v1139
    %v1177 = vmul.f32 %v963, %v1144
    %1179 = vset.pattern.permute.xlu0 3
    %1180 = vperm.xlu0 %1179, %v1122
    %v1181 = vpop.permute.xlu0 %1180
    %1184 = vset.pattern.permute.xlu0 3
    %1185 = vperm.xlu0 %1184, %v1123
    %v1186 = vpop.permute.xlu0 %1185
    %1189 = vset.pattern.permute.xlu0 3
    %1190 = vperm.xlu0 %1189, %v1124
    %v1191 = vpop.permute.xlu0 %1190
    %1194 = vset.pattern.permute.xlu0 3
    %1195 = vperm.xlu0 %1194, %v1125
    %v1196 = vpop.permute.xlu0 %1195
    %v1198 = vadd.f32 %v1146, %v1181
    %v1199 = vadd.f32 %v1147, %v1186
    %v1200 = vadd.f32 %v1148, %v1191
    %v1201 = vadd.f32 %v1149, %v1196
    %v1202 = vadd.f32 %v1150, %v1181
    %v1203 = vadd.f32 %v1151, %v1186
    %v1204 = vadd.f32 %v1152, %v1191
    %v1205 = vadd.f32 %v1153, %v1196
    %v1206 = vadd.f32 %v1154, %v1181
    %v1207 = vadd.f32 %v1155, %v1186
    %v1208 = vadd.f32 %v1156, %v1191
    %v1209 = vadd.f32 %v1157, %v1196
    %v1210 = vadd.f32 %v1158, %v1181
    %v1211 = vadd.f32 %v1159, %v1186
    %v1212 = vadd.f32 %v1160, %v1191
    %v1213 = vadd.f32 %v1161, %v1196
    %v1214 = vadd.f32 %v1162, %v1181
    %v1215 = vadd.f32 %v1163, %v1186
    %v1216 = vadd.f32 %v1164, %v1191
    %v1217 = vadd.f32 %v1165, %v1196
    %v1218 = vadd.f32 %v1166, %v1181
    %v1219 = vadd.f32 %v1167, %v1186
    %v1220 = vadd.f32 %v1168, %v1191
    %v1221 = vadd.f32 %v1169, %v1196
    %v1222 = vadd.f32 %v1170, %v1181
    %v1223 = vadd.f32 %v1171, %v1186
    %v1224 = vadd.f32 %v1172, %v1191
    %v1225 = vadd.f32 %v1173, %v1196
    %v1226 = vadd.f32 %v1174, %v1181
    %v1227 = vadd.f32 %v1175, %v1186
    %v1228 = vadd.f32 %v1176, %v1191
    %v1229 = vadd.f32 %v1177, %v1196
    %v1230 = vmax.f32 %v1198, 0.0
    %v1231 = vmax.f32 %v1199, 0.0
    %v1232 = vmax.f32 %v1200, 0.0
    %v1233 = vmax.f32 %v1201, 0.0
    %v1234 = vmax.f32 %v1202, 0.0
    %v1235 = vmax.f32 %v1203, 0.0
    %v1236 = vmax.f32 %v1204, 0.0
    %v1237 = vmax.f32 %v1205, 0.0
    %v1238 = vmax.f32 %v1206, 0.0
    %v1239 = vmax.f32 %v1207, 0.0
    %v1240 = vmax.f32 %v1208, 0.0
    %v1241 = vmax.f32 %v1209, 0.0
    %v1242 = vmax.f32 %v1210, 0.0
    %v1243 = vmax.f32 %v1211, 0.0
    %v1244 = vmax.f32 %v1212, 0.0
    %v1245 = vmax.f32 %v1213, 0.0
    %v1246 = vmax.f32 %v1214, 0.0
    %v1247 = vmax.f32 %v1215, 0.0
    %v1248 = vmax.f32 %v1216, 0.0
    %v1249 = vmax.f32 %v1217, 0.0
    %v1250 = vmax.f32 %v1218, 0.0
    %v1251 = vmax.f32 %v1219, 0.0
    %v1252 = vmax.f32 %v1220, 0.0
    %v1253 = vmax.f32 %v1221, 0.0
    %v1254 = vmax.f32 %v1222, 0.0
    %v1255 = vmax.f32 %v1223, 0.0
    %v1256 = vmax.f32 %v1224, 0.0
    %v1257 = vmax.f32 %v1225, 0.0
    %v1258 = vmax.f32 %v1226, 0.0
    %v1259 = vmax.f32 %v1227, 0.0
    %v1260 = vmax.f32 %v1228, 0.0
    %v1261 = vmax.f32 %v1229, 0.0
    %1262 = vst [vmem:[#allocation8] sm:$0xff] %v1230
    %1263 = vst [vmem:[#allocation8 + $0x8] sm:$0xff] %v1231
    %1264 = vst [vmem:[#allocation8 + $0x10] sm:$0xff] %v1232
    %1265 = vst [vmem:[#allocation8 + $0x18] sm:$0xff] %v1233
    %1266 = vst [vmem:[#allocation8 + $0x20] sm:$0xff] %v1234
    %1267 = vst [vmem:[#allocation8 + $0x28] sm:$0xff] %v1235
    %1268 = vst [vmem:[#allocation8 + $0x30] sm:$0xff] %v1236
    %1269 = vst [vmem:[#allocation8 + $0x38] sm:$0xff] %v1237
    %1270 = vst [vmem:[#allocation8 + $0x40] sm:$0xff] %v1238
    %1271 = vst [vmem:[#allocation8 + $0x48] sm:$0xff] %v1239
    %1272 = vst [vmem:[#allocation8 + $0x50] sm:$0xff] %v1240
    %1273 = vst [vmem:[#allocation8 + $0x58] sm:$0xff] %v1241
    %1274 = vst [vmem:[#allocation8 + $0x60] sm:$0xff] %v1242
    %1275 = vst [vmem:[#allocation8 + $0x68] sm:$0xff] %v1243
    %1276 = vst [vmem:[#allocation8 + $0x70] sm:$0xff] %v1244
    %1277 = vst [vmem:[#allocation8 + $0x78] sm:$0xff] %v1245
    %1278 = vst [vmem:[#allocation8 + $0x80] sm:$0xff] %v1246
    %1279 = vst [vmem:[#allocation8 + $0x88] sm:$0xff] %v1247
    %1280 = vst [vmem:[#allocation8 + $0x90] sm:$0xff] %v1248
    %1281 = vst [vmem:[#allocation8 + $0x98] sm:$0xff] %v1249
    %1282 = vst [vmem:[#allocation8 + $0xa0] sm:$0xff] %v1250
    %1283 = vst [vmem:[#allocation8 + $0xa8] sm:$0xff] %v1251
    %1284 = vst [vmem:[#allocation8 + $0xb0] sm:$0xff] %v1252
    %1285 = vst [vmem:[#allocation8 + $0xb8] sm:$0xff] %v1253
    %1286 = vst [vmem:[#allocation8 + $0xc0] sm:$0xff] %v1254
    %1287 = vst [vmem:[#allocation8 + $0xc8] sm:$0xff] %v1255
    %1288 = vst [vmem:[#allocation8 + $0xd0] sm:$0xff] %v1256
    %1289 = vst [vmem:[#allocation8 + $0xd8] sm:$0xff] %v1257
    %1290 = vst [vmem:[#allocation8 + $0xe0] sm:$0xff] %v1258
    %1291 = vst [vmem:[#allocation8 + $0xe8] sm:$0xff] %v1259
    %1292 = vst [vmem:[#allocation8 + $0xf0] sm:$0xff] %v1260
    %1293 = vst [vmem:[#allocation8 + $0xf8] sm:$0xff] %v1261
    // Predicated region
    $region34: #{tpu_custom_call.1} parent=1 // pred_check
      _
    $region35: #{tpu_custom_call.1} parent=1 // pred_check_branch
      %1295 = sbr.rel (0) target = $region37
    $region36: #{tpu_custom_call.1} parent=1 // pred_region
      %s1297 = ssub.s32 4096, 4096
      %1298 = vsyncadd [#allocation4], %s1297
      %s1299 = sshll.u32 [#allocation8], 4
      %s1300 = int_to_ptr.vmem [resolvable:$true] %s1299
      %1305 = dma.vmem_to_hbm [thread:$0]  %s1300, 4096, %s5, [#allocation4], 128, 128, 8
    $region37: #{tpu_custom_call.1} parent=1 // pred_fallthru
      _
    // Predicated region
    $region38: #{tpu_custom_call.1} parent=1 // pred_check
      _
    $region39: #{tpu_custom_call.1} parent=1 // pred_check_branch
      %1307 = sbr.rel (0) target = $region41
    $region40: #{tpu_custom_call.1} parent=1 // pred_region
      %1308 = dma.done [#allocation4], 4096
    $region41: #{tpu_custom_call.1} parent=1 // pred_fallthru
      _
    %1309 = vsyncpa [#allocation3], 1
    %1310 = vsyncpa [#allocation6], 1
    %1311 = vsyncpa [#allocation4], 1

</llo_original>
